<compile_context>
chip_gen: v5e
topology: v5e:2x2
jax: 0.10.0
libtpu: 0.0.40
codegen_flags: <defaults>
</compile_context>

<pallas_src>
import functools

import jax
import jax.numpy as jnp
from jax import lax
from jax.experimental import pallas as pl
from jax.experimental.pallas import tpu as pltpu

# Contract dim 1 (K) of x(tm, tk) with dim 1 (K) of weight(tn, tk) -> (tm, tn).
_DNUMS = (((1,), (1,)), ((), ()))


def _kernel_single_k(x_ref, w_ref, b_ref, other_ref, o_ref):
    # Whole K fits in one block: no accumulator, no init/finalize.
    acc = lax.dot_general(x_ref[...], w_ref[...], _DNUMS,
                          preferred_element_type=jnp.float32)
    o_ref[...] = (acc + b_ref[...] + other_ref[...]).astype(o_ref.dtype)


def _kernel_multi_k_f32out(x_ref, w_ref, b_ref, other_ref, o_ref):
    # f32 output: the output block is resident across the K axis, so accumulate
    # directly into o_ref (no separate VMEM scratch, no final copy pass).
    @pl.when(pl.program_id(2) == 0)
    def _():
        o_ref[...] = (other_ref[...].astype(jnp.float32)
                      + b_ref[...].astype(jnp.float32))

    o_ref[...] += lax.dot_general(x_ref[...], w_ref[...], _DNUMS,
                                  preferred_element_type=jnp.float32)


def _kernel_multi_k_acc(x_ref, w_ref, b_ref, other_ref, o_ref, acc_ref):
    # Sub-f32 output: carry an f32 accumulator in VMEM scratch across K.
    k = pl.program_id(2)

    @pl.when(k == 0)
    def _():
        acc_ref[...] = jnp.zeros_like(acc_ref)

    acc_ref[...] += lax.dot_general(x_ref[...], w_ref[...], _DNUMS,
                                    preferred_element_type=jnp.float32)

    @pl.when(k == pl.num_programs(2) - 1)
    def _():
        o_ref[...] = (acc_ref[...] + b_ref[...] + other_ref[...]).astype(o_ref.dtype)


def _round_up(x, m):
    return (x + m - 1) // m * m


@functools.partial(jax.jit, static_argnames=("tm", "tn", "tk"))
def linear_add(x, weight, bias, other, *, tm=256, tn=512, tk=512):
    """Computes x @ weight.T + bias + other  (PyTorch nn.Linear semantics).

    x:      (M, K)
    weight: (N, K)   (PyTorch Linear layout; NOT transposed in the wrapper)
    bias:   (N,)
    other:  (M, N)
    """
    M, K = x.shape
    N, K2 = weight.shape
    assert K == K2
    assert other.shape == (M, N)
    assert bias.shape == (N,)
    out_dtype = x.dtype

    # Full-dim blocks for small dims (legal per the (8,128)-or-full-dim rule);
    # avoids any padding for the common small-K / small-batch case.
    if M <= tm:
        tm = M
    if N <= tn:
        tn = N
    if K <= tk:
        tk = K

    # K is the only axis where out-of-bounds garbage would corrupt the result,
    # so zero-pad K iff it is actually split and does not divide tk evenly.
    if K > tk and K % tk != 0:
        Kp = _round_up(K, tk)
        x = jnp.pad(x, ((0, 0), (0, Kp - K)))
        weight = jnp.pad(weight, ((0, 0), (0, Kp - K)))
        K = Kp

    grid_m = pl.cdiv(M, tm)
    grid_n = pl.cdiv(N, tn)
    n_k = pl.cdiv(K, tk)

    # v7x has 2 TensorCores: if the whole (M, N) problem is a single block but N
    # is large enough to split on 128-lane boundaries, halve tn so one parallel
    # grid axis has >= 2 blocks. Edge blocks (if any) are masked on write.
    if grid_m == 1 and grid_n == 1 and N >= 256:
        tn = _round_up(pl.cdiv(N, 2), 128)
        grid_n = pl.cdiv(N, tn)

    bias2d = bias.reshape(1, N)

    itemsize = jnp.dtype(out_dtype).itemsize
    cost = pl.CostEstimate(
        flops=2 * M * N * K,
        transcendentals=0,
        bytes_accessed=(x.size * x.dtype.itemsize
                        + weight.size * weight.dtype.itemsize
                        + bias.size * bias.dtype.itemsize
                        + other.size * other.dtype.itemsize
                        + M * N * itemsize),
    )

    if n_k == 1:
        grid = (grid_m, grid_n)
        in_specs = [
            pl.BlockSpec((tm, tk), lambda i, j: (i, 0)),   # x tile
            pl.BlockSpec((tn, tk), lambda i, j: (j, 0)),   # weight (N, K) tile
            pl.BlockSpec((1, tn), lambda i, j: (0, j)),    # bias row
            pl.BlockSpec((tm, tn), lambda i, j: (i, j)),   # other tile
        ]
        out_spec = pl.BlockSpec((tm, tn), lambda i, j: (i, j))
        kernel = _kernel_single_k
        scratch = []
        dims = ("parallel", "parallel")
    else:
        grid = (grid_m, grid_n, n_k)
        in_specs = [
            pl.BlockSpec((tm, tk), lambda i, j, k: (i, k)),
            pl.BlockSpec((tn, tk), lambda i, j, k: (j, k)),
            pl.BlockSpec((1, tn), lambda i, j, k: (0, j)),
            pl.BlockSpec((tm, tn), lambda i, j, k: (i, j)),
        ]
        out_spec = pl.BlockSpec((tm, tn), lambda i, j, k: (i, j))
        dims = ("parallel", "parallel", "arbitrary")
        if out_dtype == jnp.float32:
            kernel = _kernel_multi_k_f32out
            scratch = []
        else:
            kernel = _kernel_multi_k_acc
            scratch = [pltpu.VMEM((tm, tn), jnp.float32)]

    out = pl.pallas_call(
        kernel,
        out_shape=jax.ShapeDtypeStruct((M, N), out_dtype),
        grid_spec=pltpu.PrefetchScalarGridSpec(
            num_scalar_prefetch=0,
            grid=grid,
            in_specs=in_specs,
            out_specs=out_spec,
            scratch_shapes=scratch,
        ),
        compiler_params=pltpu.CompilerParams(dimension_semantics=dims),
        cost_estimate=cost,
    )(x, weight, bias2d, other)

    return out


if __name__ == "__main__":
    # Shapes implied by the module: Linear(in_features, out_features, bias=True)
    batch = 8
    in_features = 32
    out_features = 64

    key = jax.random.PRNGKey(0)
    kx, kw, kb, ko = jax.random.split(key, 4)

    # --- Case 1: tiny shapes from the module (single-K fast path, f32) ---
    x = jax.random.normal(kx, (batch, in_features), dtype=jnp.float32)
    weight = jax.random.normal(kw, (out_features, in_features), dtype=jnp.float32) * 0.1
    bias = jax.random.normal(kb, (out_features,), dtype=jnp.float32) * 0.1
    other = jax.random.normal(ko, (batch, out_features), dtype=jnp.float32)

    out = jax.block_until_ready(linear_add(x, weight, bias, other))
    ref = x @ weight.T + bias[None, :] + other
    assert out.shape == (batch, out_features)
    assert jnp.allclose(out, ref, atol=1e-4, rtol=1e-4)

    # --- Case 2: split-K path, f32 output (accumulate into resident o_ref) ---
    M2, K2, N2 = 16, 384, 128
    x2 = jax.random.normal(kx, (M2, K2), dtype=jnp.float32)
    w2 = jax.random.normal(kw, (N2, K2), dtype=jnp.float32) * 0.1
    b2 = jax.random.normal(kb, (N2,), dtype=jnp.float32) * 0.1
    o2 = jax.random.normal(ko, (M2, N2), dtype=jnp.float32)
    out2 = jax.block_until_ready(linear_add(x2, w2, b2, o2, tk=128))
    ref2 = x2 @ w2.T + b2[None, :] + o2
    assert jnp.allclose(out2, ref2, atol=1e-4, rtol=1e-4)

    # --- Case 3: split-K path, bf16 output (f32 VMEM scratch accumulator) ---
    x3 = x2.astype(jnp.bfloat16)
    w3 = w2.astype(jnp.bfloat16)
    b3 = b2.astype(jnp.bfloat16)
    o3 = o2.astype(jnp.bfloat16)
    out3 = jax.block_until_ready(linear_add(x3, w3, b3, o3, tk=128))
    ref3 = (x3.astype(jnp.float32) @ w3.astype(jnp.float32).T
            + b3.astype(jnp.float32)[None, :] + o3.astype(jnp.float32))
    assert jnp.allclose(out3.astype(jnp.float32), ref3, atol=5e-2, rtol=5e-2)

    print("KERNEL_OK")
</pallas_src>

<mosaic_0001>
module attributes {stable_mosaic.version = 11 : i64} {
  func.func @_kernel_single_k(%arg0: i32, %arg1: i32, %arg2: memref<8x32xf32, #tpu.memory_space<vmem>>, %arg3: memref<64x32xf32, #tpu.memory_space<vmem>>, %arg4: memref<1x64xf32, #tpu.memory_space<vmem>>, %arg5: memref<8x64xf32, #tpu.memory_space<vmem>>, %arg6: memref<8x64xf32, #tpu.memory_space<vmem>>) attributes {dimension_semantics = [#tpu.dimension_semantics<parallel>, #tpu.dimension_semantics<parallel>], iteration_bounds = array<i64: 1, 1>, scalar_prefetch = 0 : i64, scratch_operands = 0 : i64, tpu.core_type = #tpu.core_type<tc>, window_params = [{transform_indices = @transform_0, window_bounds = array<i64: 8, 32>}, {transform_indices = @transform_1, window_bounds = array<i64: 64, 32>}, {transform_indices = @transform_2, window_bounds = array<i64: 1, 64>}, {transform_indices = @transform_3, window_bounds = array<i64: 8, 64>}, {transform_indices = @transform_4, window_bounds = array<i64: 8, 64>}]} {
    %c0 = arith.constant 0 : index
    %c0_0 = arith.constant 0 : index
    %0 = vector.load %arg2[%c0, %c0_0] : memref<8x32xf32, #tpu.memory_space<vmem>>, vector<8x32xf32>
    %c0_1 = arith.constant 0 : index
    %c0_2 = arith.constant 0 : index
    %1 = vector.load %arg3[%c0_1, %c0_2] : memref<64x32xf32, #tpu.memory_space<vmem>>, vector<64x32xf32>
    %cst = arith.constant dense<0.000000e+00> : vector<8x64xf32>
    %2 = tpu.matmul %0, %1, %cst {dimension_numbers = #tpu.dot_dimension_numbers<[1], [1], [0], [0], [0, 0, 1, 0], [], []>} : vector<8x32xf32>, vector<64x32xf32>, vector<8x64xf32> -> vector<8x64xf32>
    %c0_3 = arith.constant 0 : index
    %c0_4 = arith.constant 0 : index
    %3 = vector.load %arg4[%c0_3, %c0_4] : memref<1x64xf32, #tpu.memory_space<vmem>>, vector<1x64xf32>
    %4 = vector.broadcast %3 : vector<1x64xf32> to vector<8x64xf32>
    %5 = arith.addf %2, %4 : vector<8x64xf32>
    %c0_5 = arith.constant 0 : index
    %c0_6 = arith.constant 0 : index
    %6 = vector.load %arg5[%c0_5, %c0_6] : memref<8x64xf32, #tpu.memory_space<vmem>>, vector<8x64xf32>
    %7 = arith.addf %5, %6 : vector<8x64xf32>
    %c0_7 = arith.constant 0 : index
    %c0_8 = arith.constant 0 : index
    %8 = vector.load %arg6[%c0_7, %c0_8] : memref<8x64xf32, #tpu.memory_space<vmem>>, vector<8x64xf32>
    tpu.vector_store %arg6[%c0_7, %c0_8], %7 {strides = array<i32>} : memref<8x64xf32, #tpu.memory_space<vmem>>, vector<8x64xf32>,
    return
  }
  func.func @transform_0(%arg0: i32, %arg1: i32) -> (i32, i32) {
    %c0_i32 = arith.constant 0 : i32
    %c0_i32_0 = arith.constant 0 : i32
    return %arg0, %c0_i32 : i32, i32
  }
  func.func @transform_1(%arg0: i32, %arg1: i32) -> (i32, i32) {
    %c0_i32 = arith.constant 0 : i32
    %c0_i32_0 = arith.constant 0 : i32
    return %arg1, %c0_i32 : i32, i32
  }
  func.func @transform_2(%arg0: i32, %arg1: i32) -> (i32, i32) {
    %c0_i32 = arith.constant 0 : i32
    %c0_i32_0 = arith.constant 0 : i32
    return %c0_i32, %arg1 : i32, i32
  }
  func.func @transform_3(%arg0: i32, %arg1: i32) -> (i32, i32) {
    %c0_i32 = arith.constant 0 : i32
    return %arg0, %arg1 : i32, i32
  }
  func.func @transform_4(%arg0: i32, %arg1: i32) -> (i32, i32) {
    %c0_i32 = arith.constant 0 : i32
    return %arg0, %arg1 : i32, i32
  }
}

</mosaic_0001>

<llo_original>
// kernel: linear_add.1
$region0: #{linear_add.1}
  #allocation0 [shape = 'u32[]', space=smem, size = 0x4, offset = 0x4, fixed_abs, tag = 'smem constant byte address 0x4 - core index']
  #allocation1 [shape = 'u32[72,128]{1,0:T(1,128)}', space=vmem, size = 0x9000, scoped, tag = 'internal scratch']
  %s0 = inlined_call_operand.vmem [shape: f32[8,32], index: 0, kind: input, shape index: {}]
  %s1 = inlined_call_operand.vmem [shape: f32[64,32], index: 1, kind: input, shape index: {}]
  %s2 = inlined_call_operand.vmem [shape: f32[1,64], index: 2, kind: input, shape index: {}]
  %s3 = inlined_call_operand.vmem [shape: f32[8,64], index: 3, kind: input, shape index: {}]
  %s4 = inlined_call_operand.hbm [shape: f32[8,64], index: 4, kind: output, shape index: {}]
  %s5 = sld [smem:[#allocation0]]
  $region26: #{linear_add.1} parent=0
    _
  %s7 = ssub.s32 1, %s5
  %s8 = scalar_select 0, %s7, %s5
  $region1: #{linear_add.1} parent=0
    #allocation2 [shape = 'u8[4096]{0}', space=vmem, size = 0x1000, scoped, tag = 'output window, operand 0, single buffered']
    #allocation3 [shape = 's32[1]{0}', space=sflag, size = 0x4, scoped, tag = 'scoped memory for linear_add.1']
    %9 = vsyncpa [#allocation3], 0
    // Predicated region
    $region2: #{linear_add.1} parent=1 // pred_check
      _
    $region3: #{linear_add.1} parent=1 // pred_check_branch
      %11 = sbr.rel (0) target = $region5
    $region4: #{linear_add.1} parent=1 // pred_region
      _
    $region5: #{linear_add.1} parent=1 // pred_fallthru
      _
    // Predicated region
    $region6: #{linear_add.1} parent=1 // pred_check
      _
    $region7: #{linear_add.1} parent=1 // pred_check_branch
      %13 = sbr.rel (0) target = $region9
    $region8: #{linear_add.1} parent=1 // pred_region
      _
    $region9: #{linear_add.1} parent=1 // pred_fallthru
      _
    // Predicated region
    $region10: #{linear_add.1} parent=1 // pred_check
      _
    $region11: #{linear_add.1} parent=1 // pred_check_branch
      %15 = sbr.rel (0) target = $region13
    $region12: #{linear_add.1} parent=1 // pred_region
      _
    $region13: #{linear_add.1} parent=1 // pred_fallthru
      _
    // Predicated region
    $region14: #{linear_add.1} parent=1 // pred_check
      _
    $region15: #{linear_add.1} parent=1 // pred_check_branch
      %17 = sbr.rel (0) target = $region17
    $region16: #{linear_add.1} parent=1 // pred_region
      _
    $region17: #{linear_add.1} parent=1 // pred_fallthru
      _
    %v18 = vld [vmem:[%s0] sm:$0xff]
    %v19 = vld [vmem:[%s1] sm:$0xff]
    %v20 = vld [vmem:[%s1 + $0x8] sm:$0xff]
    %v21 = vld [vmem:[%s1 + $0x10] sm:$0xff]
    %v22 = vld [vmem:[%s1 + $0x18] sm:$0xff]
    %v23 = vld [vmem:[%s1 + $0x20] sm:$0xff]
    %v24 = vld [vmem:[%s1 + $0x28] sm:$0xff]
    %v25 = vld [vmem:[%s1 + $0x30] sm:$0xff]
    %v26 = vld [vmem:[%s1 + $0x38] sm:$0xff]
    %v27 = vld [vmem:[%s2] sm:$0x1]
    %v29 = vperm.slane %v27, 0
    %vm31 = vcmask 261120
    %v33 = vsel %vm31, %v18, 0
    %v36 = vsel %vm31, %v19, 0
    %v39 = vsel %vm31, %v20, 0
    %v42 = vsel %vm31, %v21, 0
    %v45 = vsel %vm31, %v22, 0
    %v48 = vsel %vm31, %v23, 0
    %v51 = vsel %vm31, %v24, 0
    %v54 = vsel %vm31, %v25, 0
    %v57 = vsel %vm31, %v26, 0
    %59 = vmatpush.xpose.msra.mxu0 0.0
    %60 = vmatpush.xpose.msra.mxu0 0.0
    %61 = vmatpush.xpose.msra.mxu0 0.0
    %62 = vmatpush.xpose.msra.mxu0 0.0
    %63 = vmatpush.xpose.msra.mxu0 0.0
    %64 = vmatpush.xpose.msra.mxu0 0.0
    %65 = vmatpush.xpose.msra.mxu0 0.0
    %66 = vmatpush.xpose.msra.mxu0 0.0
    %67 = vmatpush.xpose.msra.mxu0 %v57
    %68 = vmatpush.xpose.msra.mxu0 %v54
    %69 = vmatpush.xpose.msra.mxu0 %v51
    %70 = vmatpush.xpose.msra.mxu0 %v48
    %71 = vmatpush.xpose.msra.mxu0 %v45
    %72 = vmatpush.xpose.msra.mxu0 %v42
    %73 = vmatpush.xpose.msra.mxu0 %v39
    %74 = vmatpush.xpose.msra.mxu0 %v36
    %75 = vmatmul.f32.gmra.mxu0 %v33
    %v76 = vpop.f32.mrf.mxu0
    %v77 = vadd.f32 %v29, %v76
    %78 = vdwg.mxu0
    %v79 = vld [vmem:[%s3] sm:$0xff]
    %v80 = vadd.f32 %v77, %v79
    %vm81 = vcmask 523264
    %82 = vst.msk [vmem:[#allocation2] sm:$0xff] %vm81, %v80
    // Predicated region
    $region18: #{linear_add.1} parent=1 // pred_check
      _
    $region19: #{linear_add.1} parent=1 // pred_check_branch
      %84 = sbr.rel (0) target = $region21
    $region20: #{linear_add.1} parent=1 // pred_region
      %86 = vsyncadd [#allocation3], 0
      %s88 = sshll.u32 [#allocation2], 4
      %s89 = int_to_ptr.vmem [resolvable:$true] %s88
      %s90 = sshll.u32 %s4, 4
      %s91 = int_to_ptr.hbm [resolvable:$true] %s90
      %93 = dma.vmem_to_hbm [thread:$0]  %s89, 128, %s91, [#allocation3]
    $region21: #{linear_add.1} parent=1 // pred_fallthru
      _
    // Predicated region
    $region22: #{linear_add.1} parent=1 // pred_check
      _
    $region23: #{linear_add.1} parent=1 // pred_check_branch
      %95 = sbr.rel (0) target = $region25
    $region24: #{linear_add.1} parent=1 // pred_region
      %97 = dma.done [#allocation3], 128
    $region25: #{linear_add.1} parent=1 // pred_fallthru
      _
    %98 = vsyncpa [#allocation3], 1

</llo_original>
